<compile_context>
chip_gen: v7x
topology: tpu7x:2x2x1
jax: 0.10.0
libtpu: 0.0.40
codegen_flags: <defaults>
</compile_context>

<pallas_src>
import math

import jax
import jax.numpy as jnp
from jax.experimental import pallas as pl
from jax.experimental.pallas import tpu as pltpu


def _round_up(n, m):
    return ((n + m - 1) // m) * m


def _make_kernel(d_out, d_pad):
    """Kernel factory closing over the static output width.

    When d_out != d_pad the final store slices the valid columns (masked store)
    so the HBM output is exactly (B, d_out) and no post-kernel slice is needed.
    """

    def kernel(x_ref,
               w1_ref, b1_ref, w2_ref, b2_ref, w34_ref, b34_ref,
               w5_ref, b5_ref, w6_ref, b6_ref,
               out_ref):
        # x arrives as fp32 (aligned fast path) or pre-padded bf16; cast is a no-op
        # in the latter case. All matmuls use bf16 operands, fp32 accumulation.
        x = x_ref[...].astype(jnp.bfloat16)

        # encoder L1 + ReLU
        h = jnp.dot(x, w1_ref[...], preferred_element_type=jnp.float32) + b1_ref[...]
        h = jnp.maximum(h, 0.0).astype(jnp.bfloat16)

        # encoder L2 + ReLU   (Dropout(0.2) is identity in eval mode)
        h = jnp.dot(h, w2_ref[...], preferred_element_type=jnp.float32) + b2_ref[...]
        h = jnp.maximum(h, 0.0).astype(jnp.bfloat16)

        # encoder L3 (no activation) fused with decoder L1, then ReLU
        h = jnp.dot(h, w34_ref[...], preferred_element_type=jnp.float32) + b34_ref[...]
        h = jnp.maximum(h, 0.0).astype(jnp.bfloat16)

        # decoder L2 + ReLU
        h = jnp.dot(h, w5_ref[...], preferred_element_type=jnp.float32) + b5_ref[...]
        h = jnp.maximum(h, 0.0).astype(jnp.bfloat16)

        # decoder L3 + Sigmoid. sigmoid(d) = 1 / (1 + exp(-d)); exp and the
        # reciprocal both run on the EUP slot (free relative to VALU/MXU).
        d = jnp.dot(h, w6_ref[...], preferred_element_type=jnp.float32) + b6_ref[...]
        sig = pl.reciprocal(1.0 + jnp.exp(-d), approx=True)

        if d_out == d_pad:
            out_ref[...] = sig.astype(out_ref.dtype)
        else:
            out_ref[...] = sig[:, :d_out].astype(out_ref.dtype)

    return kernel


def prepare_params(params):
    """One-time parameter preparation — do NOT call per forward pass.

    Folds encoder L3 with decoder L1 (exact: no nonlinearity between them),
    pads the feature dim to a lane multiple (zeros contribute nothing), and
    casts matmul operands to bf16 (biases stay fp32)."""
    f32, bf16 = jnp.float32, jnp.bfloat16
    D, H = params["w1"].shape                     # (input_dim, 256)
    D_pad = _round_up(D, 128)

    # Fold: z @ w3 @ w4 + (b3 @ w4 + b4), done in fp32 before the bf16 cast.
    w3 = params["w3"].astype(f32)
    w4 = params["w4"].astype(f32)
    w34 = (w3 @ w4).astype(bf16)                                        # (H, H)
    b34 = (params["b3"].astype(f32).reshape(1, -1) @ w4
           + params["b4"].astype(f32).reshape(1, -1))                   # (1, H)

    # Lane-pad the feature dim on w1 rows / w6 cols / b6 (zeros are exact).
    w1 = jnp.zeros((D_pad, H), f32).at[:D, :].set(params["w1"].astype(f32)).astype(bf16)
    w6 = jnp.zeros((H, D_pad), f32).at[:, :D].set(params["w6"].astype(f32)).astype(bf16)
    b6 = jnp.zeros((1, D_pad), f32).at[:, :D].set(params["b6"].astype(f32).reshape(1, -1))

    weights = (
        w1, params["b1"].astype(f32).reshape(1, -1),
        params["w2"].astype(bf16), params["b2"].astype(f32).reshape(1, -1),
        w34, b34,
        params["w5"].astype(bf16), params["b5"].astype(f32).reshape(1, -1),
        w6, b6,
    )
    weights = tuple(jax.block_until_ready(w) for w in weights)
    return {"weights": weights, "d_in": int(D), "d_pad": int(D_pad), "hidden": int(H)}


def autoencoder_deeper_forward(x, prepared, *, tile_b=None, out_dtype=jnp.float32):
    """x: (B, input_dim) float32. prepared: output of prepare_params()."""
    B, D = x.shape
    if D != prepared["d_in"]:
        raise ValueError(f"input feature dim {D} != prepared dim {prepared['d_in']}")
    D_pad = prepared["d_pad"]
    weights = prepared["weights"]
    out_itemsize = jnp.dtype(out_dtype).itemsize

    # ----- batch tile selection -----
    if tile_b is None:
        if B < 256:
            # Tiny batch: latency-bound; one full-array block, no padding passes.
            tile_b = B
        else:
            # Keep double-buffered x + out blocks under ~24 MiB (safe within
            # v7x's 64 MiB VMEM together with weights/activations), cap at 2048.
            bytes_per_row = D_pad * 4 + D * out_itemsize      # fp32 x worst case
            max_rows = (24 * 1024 * 1024) // (2 * bytes_per_row)
            tile_b = max(256, min(2048, (max_rows // 256) * 256))
            if B >= 512:
                # Keep >= 2 grid steps so both v7x TensorCores get work and the
                # software pipeline has something to overlap.
                tile_b = min(tile_b, _round_up(-(-B // 2), 256))
            else:
                tile_b = min(tile_b, _round_up(B, 256))
    B_pad = _round_up(B, tile_b)

    needs_col_pad = (D_pad != D)
    needs_row_pad = (B_pad != B)

    # ----- input preparation -----
    if needs_col_pad or needs_row_pad:
        # Padding pass only when shapes are not aligned; pad in bf16 to keep the
        # extra HBM traffic (and the kernel's input DMA) as small as possible.
        x_in = jnp.zeros((B_pad, D_pad), jnp.bfloat16).at[:B, :D].set(
            x.astype(jnp.bfloat16))
    else:
        # Aligned fast path: fp32 x goes straight into the kernel (cast to bf16
        # in-register), no wrapper-side HBM pass at all.
        x_in = x

    grid = (B_pad // tile_b,)
    kernel = _make_kernel(D, D_pad)

    # Grid-invariant weight/bias blocks (whole array, block index (0, 0)).
    # TODO(synk): pipeline_mode=pl.Buffered(1) would drop their redundant second
    # buffer (<1 MiB here), skipped to keep the lowering maximally portable.
    def full_spec(arr):
        return pl.BlockSpec(arr.shape, lambda i: (0, 0))

    in_specs = [pl.BlockSpec((tile_b, x_in.shape[1]), lambda i: (i, 0))]
    in_specs += [full_spec(a) for a in weights]
    # Output last dim equals the true feature dim (full-array dim => always a
    # legal block dim), so no padded output buffer or column slice is needed.
    out_specs = pl.BlockSpec((tile_b, D), lambda i: (i, 0))

    out = pl.pallas_call(
        kernel,
        out_shape=jax.ShapeDtypeStruct((B_pad, D), out_dtype),
        grid_spec=pltpu.PrefetchScalarGridSpec(
            num_scalar_prefetch=0,
            grid=grid,
            in_specs=in_specs,
            out_specs=out_specs,
        ),
        compiler_params=pltpu.CompilerParams(
            dimension_semantics=("parallel",),
            vmem_limit_bytes=48 * 1024 * 1024,   # < v7x's 64 MiB physical VMEM
        ),
    )(x_in, *weights)

    if needs_row_pad:
        out = out[:B]
    return out


def init_params(key, input_dim, embedding_dim, hidden=256):
    """Deterministic init mimicking torch.nn.Linear default (U[-1/sqrt(fan_in), ...]).
    Weights stored transposed as (in_features, out_features)."""
    dims = [
        (input_dim, hidden),      # encoder L1
        (hidden, hidden),         # encoder L2
        (hidden, embedding_dim),  # encoder L3
        (embedding_dim, hidden),  # decoder L1
        (hidden, hidden),         # decoder L2
        (hidden, input_dim),      # decoder L3
    ]
    params = {}
    keys = jax.random.split(key, 2 * len(dims))
    for idx, (fan_in, fan_out) in enumerate(dims):
        bound = 1.0 / math.sqrt(fan_in)
        w = jax.random.uniform(keys[2 * idx], (fan_in, fan_out),
                               minval=-bound, maxval=bound, dtype=jnp.float32)
        b = jax.random.uniform(keys[2 * idx + 1], (1, fan_out),
                               minval=-bound, maxval=bound, dtype=jnp.float32)
        params[f"w{idx + 1}"] = w
        params[f"b{idx + 1}"] = b
    return params


def reference_forward(x, p):
    """fp32 reference matching the original PyTorch module (eval mode)."""
    h = jnp.maximum(x @ p["w1"] + p["b1"], 0.0)
    h = jnp.maximum(h @ p["w2"] + p["b2"], 0.0)
    z = h @ p["w3"] + p["b3"]
    d = jnp.maximum(z @ p["w4"] + p["b4"], 0.0)
    d = jnp.maximum(d @ p["w5"] + p["b5"], 0.0)
    d = d @ p["w6"] + p["b6"]
    return jax.nn.sigmoid(d)


if __name__ == "__main__":
    key = jax.random.PRNGKey(0)
    k_x, k_p, k_x2 = jax.random.split(key, 3)

    # ---- Case 1: small batch, feature dim NOT lane-aligned (padded path) ----
    batch, input_dim, embedding_dim = 8, 64, 32
    params = init_params(k_p, input_dim, embedding_dim)
    prepared = prepare_params(params)          # one-time prep, outside the call path
    x = jax.random.normal(k_x, (batch, input_dim), dtype=jnp.float32)

    fwd = jax.jit(lambda xx: autoencoder_deeper_forward(xx, prepared))
    out = jax.block_until_ready(fwd(x))
    ref = reference_forward(x, params)
    assert out.shape == (batch, input_dim)
    assert out.dtype == jnp.float32
    # bf16 matmul operands (fp32 accumulation) + w3@w4 fold + approx reciprocal:
    # loosened tolerance vs the fp32 reference; sigmoid keeps abs error small.
    assert jnp.max(jnp.abs(out - ref)) < 2e-2

    # ---- Case 2: lane-aligned D, multi-step parallel grid, bf16 output ----
    batch2, input_dim2 = 512, 128
    params2 = init_params(jax.random.PRNGKey(1), input_dim2, embedding_dim)
    prepared2 = prepare_params(params2)
    x2 = jax.random.normal(k_x2, (batch2, input_dim2), dtype=jnp.float32)
    out2 = jax.block_until_ready(
        autoencoder_deeper_forward(x2, prepared2, out_dtype=jnp.bfloat16))
    ref2 = reference_forward(x2, params2)
    assert out2.shape == (batch2, input_dim2)
    assert out2.dtype == jnp.bfloat16
    assert jnp.max(jnp.abs(out2.astype(jnp.float32) - ref2)) < 2e-2

    print("KERNEL_OK")
</pallas_src>

<mosaic_0001>
module attributes {stable_mosaic.version = 11 : i64} {
  func.func @kernel(%arg0: i32, %arg1: memref<8x128xbf16, #tpu.memory_space<vmem>>, %arg2: memref<128x256xbf16, #tpu.memory_space<vmem>>, %arg3: memref<1x256xf32, #tpu.memory_space<vmem>>, %arg4: memref<256x256xbf16, #tpu.memory_space<vmem>>, %arg5: memref<1x256xf32, #tpu.memory_space<vmem>>, %arg6: memref<256x256xbf16, #tpu.memory_space<vmem>>, %arg7: memref<1x256xf32, #tpu.memory_space<vmem>>, %arg8: memref<256x256xbf16, #tpu.memory_space<vmem>>, %arg9: memref<1x256xf32, #tpu.memory_space<vmem>>, %arg10: memref<256x128xbf16, #tpu.memory_space<vmem>>, %arg11: memref<1x128xf32, #tpu.memory_space<vmem>>, %arg12: memref<8x64xf32, #tpu.memory_space<vmem>>) attributes {dimension_semantics = [#tpu.dimension_semantics<parallel>], iteration_bounds = array<i64: 1>, scalar_prefetch = 0 : i64, scratch_operands = 0 : i64, tpu.core_type = #tpu.core_type<tc>, window_params = [{transform_indices = @transform_0, window_bounds = array<i64: 8, 128>}, {pipeline_mode = #tpu.pipeline_mode<synchronous>, transform_indices = @transform_1, window_bounds = array<i64: 128, 256>}, {pipeline_mode = #tpu.pipeline_mode<synchronous>, transform_indices = @transform_2, window_bounds = array<i64: 1, 256>}, {pipeline_mode = #tpu.pipeline_mode<synchronous>, transform_indices = @transform_3, window_bounds = array<i64: 256, 256>}, {pipeline_mode = #tpu.pipeline_mode<synchronous>, transform_indices = @transform_4, window_bounds = array<i64: 1, 256>}, {pipeline_mode = #tpu.pipeline_mode<synchronous>, transform_indices = @transform_5, window_bounds = array<i64: 256, 256>}, {pipeline_mode = #tpu.pipeline_mode<synchronous>, transform_indices = @transform_6, window_bounds = array<i64: 1, 256>}, {pipeline_mode = #tpu.pipeline_mode<synchronous>, transform_indices = @transform_7, window_bounds = array<i64: 256, 256>}, {pipeline_mode = #tpu.pipeline_mode<synchronous>, transform_indices = @transform_8, window_bounds = array<i64: 1, 256>}, {pipeline_mode = #tpu.pipeline_mode<synchronous>, transform_indices = @transform_9, window_bounds = array<i64: 256, 128>}, {pipeline_mode = #tpu.pipeline_mode<synchronous>, transform_indices = @transform_10, window_bounds = array<i64: 1, 128>}, {transform_indices = @transform_11, window_bounds = array<i64: 8, 64>}]} {
    %c0 = arith.constant 0 : index
    %c0_0 = arith.constant 0 : index
    %0 = vector.load %arg1[%c0, %c0_0] : memref<8x128xbf16, #tpu.memory_space<vmem>>, vector<8x128xbf16>
    %c0_1 = arith.constant 0 : index
    %c0_2 = arith.constant 0 : index
    %1 = vector.load %arg2[%c0_1, %c0_2] : memref<128x256xbf16, #tpu.memory_space<vmem>>, vector<128x256xbf16>
    %cst = arith.constant dense<0.000000e+00> : vector<8x256xf32>
    %2 = tpu.matmul %0, %1, %cst {dimension_numbers = #tpu.dot_dimension_numbers<[1], [0], [0], [1], [0, 0, 1, 1], [], []>} : vector<8x128xbf16>, vector<128x256xbf16>, vector<8x256xf32> -> vector<8x256xf32>
    %c0_3 = arith.constant 0 : index
    %c0_4 = arith.constant 0 : index
    %3 = vector.load %arg3[%c0_3, %c0_4] : memref<1x256xf32, #tpu.memory_space<vmem>>, vector<1x256xf32>
    %4 = vector.broadcast %3 : vector<1x256xf32> to vector<8x256xf32>
    %5 = arith.addf %2, %4 : vector<8x256xf32>
    %cst_5 = arith.constant 0.000000e+00 : f32
    %6 = vector.broadcast %cst_5 : f32 to vector<8x256xf32>
    %7 = arith.maximumf %5, %6 : vector<8x256xf32>
    %8 = arith.truncf %7 : vector<8x256xf32> to vector<8x256xbf16>
    %c0_6 = arith.constant 0 : index
    %c0_7 = arith.constant 0 : index
    %9 = vector.load %arg4[%c0_6, %c0_7] : memref<256x256xbf16, #tpu.memory_space<vmem>>, vector<256x256xbf16>
    %cst_8 = arith.constant dense<0.000000e+00> : vector<8x256xf32>
    %10 = tpu.matmul %8, %9, %cst_8 {dimension_numbers = #tpu.dot_dimension_numbers<[1], [0], [0], [1], [0, 0, 1, 1], [], []>} : vector<8x256xbf16>, vector<256x256xbf16>, vector<8x256xf32> -> vector<8x256xf32>
    %c0_9 = arith.constant 0 : index
    %c0_10 = arith.constant 0 : index
    %11 = vector.load %arg5[%c0_9, %c0_10] : memref<1x256xf32, #tpu.memory_space<vmem>>, vector<1x256xf32>
    %12 = vector.broadcast %11 : vector<1x256xf32> to vector<8x256xf32>
    %13 = arith.addf %10, %12 : vector<8x256xf32>
    %cst_11 = arith.constant 0.000000e+00 : f32
    %14 = vector.broadcast %cst_11 : f32 to vector<8x256xf32>
    %15 = arith.maximumf %13, %14 : vector<8x256xf32>
    %16 = arith.truncf %15 : vector<8x256xf32> to vector<8x256xbf16>
    %c0_12 = arith.constant 0 : index
    %c0_13 = arith.constant 0 : index
    %17 = vector.load %arg6[%c0_12, %c0_13] : memref<256x256xbf16, #tpu.memory_space<vmem>>, vector<256x256xbf16>
    %cst_14 = arith.constant dense<0.000000e+00> : vector<8x256xf32>
    %18 = tpu.matmul %16, %17, %cst_14 {dimension_numbers = #tpu.dot_dimension_numbers<[1], [0], [0], [1], [0, 0, 1, 1], [], []>} : vector<8x256xbf16>, vector<256x256xbf16>, vector<8x256xf32> -> vector<8x256xf32>
    %c0_15 = arith.constant 0 : index
    %c0_16 = arith.constant 0 : index
    %19 = vector.load %arg7[%c0_15, %c0_16] : memref<1x256xf32, #tpu.memory_space<vmem>>, vector<1x256xf32>
    %20 = vector.broadcast %19 : vector<1x256xf32> to vector<8x256xf32>
    %21 = arith.addf %18, %20 : vector<8x256xf32>
    %cst_17 = arith.constant 0.000000e+00 : f32
    %22 = vector.broadcast %cst_17 : f32 to vector<8x256xf32>
    %23 = arith.maximumf %21, %22 : vector<8x256xf32>
    %24 = arith.truncf %23 : vector<8x256xf32> to vector<8x256xbf16>
    %c0_18 = arith.constant 0 : index
    %c0_19 = arith.constant 0 : index
    %25 = vector.load %arg8[%c0_18, %c0_19] : memref<256x256xbf16, #tpu.memory_space<vmem>>, vector<256x256xbf16>
    %cst_20 = arith.constant dense<0.000000e+00> : vector<8x256xf32>
    %26 = tpu.matmul %24, %25, %cst_20 {dimension_numbers = #tpu.dot_dimension_numbers<[1], [0], [0], [1], [0, 0, 1, 1], [], []>} : vector<8x256xbf16>, vector<256x256xbf16>, vector<8x256xf32> -> vector<8x256xf32>
    %c0_21 = arith.constant 0 : index
    %c0_22 = arith.constant 0 : index
    %27 = vector.load %arg9[%c0_21, %c0_22] : memref<1x256xf32, #tpu.memory_space<vmem>>, vector<1x256xf32>
    %28 = vector.broadcast %27 : vector<1x256xf32> to vector<8x256xf32>
    %29 = arith.addf %26, %28 : vector<8x256xf32>
    %cst_23 = arith.constant 0.000000e+00 : f32
    %30 = vector.broadcast %cst_23 : f32 to vector<8x256xf32>
    %31 = arith.maximumf %29, %30 : vector<8x256xf32>
    %32 = arith.truncf %31 : vector<8x256xf32> to vector<8x256xbf16>
    %c0_24 = arith.constant 0 : index
    %c0_25 = arith.constant 0 : index
    %33 = vector.load %arg10[%c0_24, %c0_25] : memref<256x128xbf16, #tpu.memory_space<vmem>>, vector<256x128xbf16>
    %cst_26 = arith.constant dense<0.000000e+00> : vector<8x128xf32>
    %34 = tpu.matmul %32, %33, %cst_26 {dimension_numbers = #tpu.dot_dimension_numbers<[1], [0], [0], [1], [0, 0, 1, 1], [], []>} : vector<8x256xbf16>, vector<256x128xbf16>, vector<8x128xf32> -> vector<8x128xf32>
    %c0_27 = arith.constant 0 : index
    %c0_28 = arith.constant 0 : index
    %35 = vector.load %arg11[%c0_27, %c0_28] : memref<1x128xf32, #tpu.memory_space<vmem>>, vector<1x128xf32>
    %36 = vector.broadcast %35 : vector<1x128xf32> to vector<8x128xf32>
    %37 = arith.addf %34, %36 : vector<8x128xf32>
    %cst_29 = arith.constant 0.000000e+00 : f32
    %38 = vector.broadcast %cst_29 : f32 to vector<8x128xf32>
    %39 = arith.subf %38, %37 : vector<8x128xf32>
    %40 = math.exp %39 : vector<8x128xf32>
    %cst_30 = arith.constant 1.000000e+00 : f32
    %41 = vector.broadcast %cst_30 : f32 to vector<8x128xf32>
    %42 = arith.addf %41, %40 : vector<8x128xf32>
    %43 = tpu.reciprocal %42 {approx = true} : vector<8x128xf32> -> vector<8x128xf32>
    %44 = vector.extract_strided_slice %43 {offsets = [0, 0], sizes = [8, 64], strides = [1, 1]} : vector<8x128xf32> to vector<8x64xf32>
    %c0_31 = arith.constant 0 : index
    %c0_32 = arith.constant 0 : index
    %45 = vector.load %arg12[%c0_31, %c0_32] : memref<8x64xf32, #tpu.memory_space<vmem>>, vector<8x64xf32>
    tpu.vector_store %arg12[%c0_31, %c0_32], %44 {strides = array<i32>} : memref<8x64xf32, #tpu.memory_space<vmem>>, vector<8x64xf32>,
    return
  }
  func.func @transform_0(%arg0: i32) -> (i32, i32) {
    %c0_i32 = arith.constant 0 : i32
    %c0_i32_0 = arith.constant 0 : i32
    return %arg0, %c0_i32 : i32, i32
  }
  func.func @transform_1(%arg0: i32) -> (i32, i32) {
    %c0_i32 = arith.constant 0 : i32
    %c0_i32_0 = arith.constant 0 : i32
    %c0_i32_1 = arith.constant 0 : i32
    return %c0_i32, %c0_i32_0 : i32, i32
  }
  func.func @transform_2(%arg0: i32) -> (i32, i32) {
    %c0_i32 = arith.constant 0 : i32
    %c0_i32_0 = arith.constant 0 : i32
    %c0_i32_1 = arith.constant 0 : i32
    return %c0_i32, %c0_i32_0 : i32, i32
  }
  func.func @transform_3(%arg0: i32) -> (i32, i32) {
    %c0_i32 = arith.constant 0 : i32
    %c0_i32_0 = arith.constant 0 : i32
    %c0_i32_1 = arith.constant 0 : i32
    return %c0_i32, %c0_i32_0 : i32, i32
  }
  func.func @transform_4(%arg0: i32) -> (i32, i32) {
    %c0_i32 = arith.constant 0 : i32
    %c0_i32_0 = arith.constant 0 : i32
    %c0_i32_1 = arith.constant 0 : i32
    return %c0_i32, %c0_i32_0 : i32, i32
  }
  func.func @transform_5(%arg0: i32) -> (i32, i32) {
    %c0_i32 = arith.constant 0 : i32
    %c0_i32_0 = arith.constant 0 : i32
    %c0_i32_1 = arith.constant 0 : i32
    return %c0_i32, %c0_i32_0 : i32, i32
  }
  func.func @transform_6(%arg0: i32) -> (i32, i32) {
    %c0_i32 = arith.constant 0 : i32
    %c0_i32_0 = arith.constant 0 : i32
    %c0_i32_1 = arith.constant 0 : i32
    return %c0_i32, %c0_i32_0 : i32, i32
  }
  func.func @transform_7(%arg0: i32) -> (i32, i32) {
    %c0_i32 = arith.constant 0 : i32
    %c0_i32_0 = arith.constant 0 : i32
    %c0_i32_1 = arith.constant 0 : i32
    return %c0_i32, %c0_i32_0 : i32, i32
  }
  func.func @transform_8(%arg0: i32) -> (i32, i32) {
    %c0_i32 = arith.constant 0 : i32
    %c0_i32_0 = arith.constant 0 : i32
    %c0_i32_1 = arith.constant 0 : i32
    return %c0_i32, %c0_i32_0 : i32, i32
  }
  func.func @transform_9(%arg0: i32) -> (i32, i32) {
    %c0_i32 = arith.constant 0 : i32
    %c0_i32_0 = arith.constant 0 : i32
    %c0_i32_1 = arith.constant 0 : i32
    return %c0_i32, %c0_i32_0 : i32, i32
  }
  func.func @transform_10(%arg0: i32) -> (i32, i32) {
    %c0_i32 = arith.constant 0 : i32
    %c0_i32_0 = arith.constant 0 : i32
    %c0_i32_1 = arith.constant 0 : i32
    return %c0_i32, %c0_i32_0 : i32, i32
  }
  func.func @transform_11(%arg0: i32) -> (i32, i32) {
    %c0_i32 = arith.constant 0 : i32
    %c0_i32_0 = arith.constant 0 : i32
    return %arg0, %c0_i32 : i32, i32
  }
}

</mosaic_0001>

<llo_original>
// kernel: _lambda_.1
$region0: #{_lambda_.1}
  #allocation0 [shape = 'u32[]', space=smem, size = 0x4, offset = 0x4, fixed_abs, tag = 'smem constant byte address 0x4 - core index']
  #allocation1 [shape = 'u32[144,128]{1,0:T(1,128)}', space=vmem, size = 0x12000, scoped, tag = 'internal scratch']
  %s0 = inlined_call_operand.vmem [shape: bf16[8,128], index: 0, kind: input, shape index: {}]
  %s1 = inlined_call_operand.vmem [shape: bf16[128,256], index: 1, kind: input, shape index: {}]
  %s2 = inlined_call_operand.vmem [shape: f32[1,256], index: 2, kind: input, shape index: {}]
  %s3 = inlined_call_operand.vmem [shape: bf16[256,256], index: 3, kind: input, shape index: {}]
  %s4 = inlined_call_operand.vmem [shape: f32[1,256], index: 4, kind: input, shape index: {}]
  %s5 = inlined_call_operand.vmem [shape: bf16[256,256], index: 5, kind: input, shape index: {}]
  %s6 = inlined_call_operand.vmem [shape: f32[1,256], index: 6, kind: input, shape index: {}]
  %s7 = inlined_call_operand.vmem [shape: bf16[256,256], index: 7, kind: input, shape index: {}]
  %s8 = inlined_call_operand.vmem [shape: f32[1,256], index: 8, kind: input, shape index: {}]
  %s9 = inlined_call_operand.vmem [shape: bf16[256,128], index: 9, kind: input, shape index: {}]
  %s10 = inlined_call_operand.vmem [shape: f32[1,128], index: 10, kind: input, shape index: {}]
  %s11 = inlined_call_operand.hbm [shape: f32[8,64], index: 11, kind: output, shape index: {}]
  %s12 = sld [smem:[#allocation0]]
  $region54: #{_lambda_.1} parent=0
    _
  %s14 = ssub.s32 1, %s12
  %s15 = scalar_select 0, %s14, %s12
  $region1: #{_lambda_.1} parent=0
    #allocation2 [shape = 'u8[4096]{0}', space=vmem, size = 0x1000, scoped, tag = 'output window, operand 0, single buffered']
    #allocation3 [shape = 's32[1]{0}', space=sflag, size = 0x4, scoped, tag = 'scoped memory for _lambda_.1']
    %16 = vsyncpa [#allocation3], 0
    // Predicated region
    $region2: #{_lambda_.1} parent=1 // pred_check
      _
    $region3: #{_lambda_.1} parent=1 // pred_check_branch
      %18 = sbr.rel (0) target = $region5
    $region4: #{_lambda_.1} parent=1 // pred_region
      _
    $region5: #{_lambda_.1} parent=1 // pred_fallthru
      _
    // Predicated region
    $region6: #{_lambda_.1} parent=1 // pred_check
      _
    $region7: #{_lambda_.1} parent=1 // pred_check_branch
      %20 = sbr.rel (0) target = $region9
    $region8: #{_lambda_.1} parent=1 // pred_region
      _
    $region9: #{_lambda_.1} parent=1 // pred_fallthru
      _
    // Predicated region
    $region10: #{_lambda_.1} parent=1 // pred_check
      _
    $region11: #{_lambda_.1} parent=1 // pred_check_branch
      %22 = sbr.rel (0) target = $region13
    $region12: #{_lambda_.1} parent=1 // pred_region
      _
    $region13: #{_lambda_.1} parent=1 // pred_fallthru
      _
    // Predicated region
    $region14: #{_lambda_.1} parent=1 // pred_check
      _
    $region15: #{_lambda_.1} parent=1 // pred_check_branch
      %24 = sbr.rel (0) target = $region17
    $region16: #{_lambda_.1} parent=1 // pred_region
      _
    $region17: #{_lambda_.1} parent=1 // pred_fallthru
      _
    // Predicated region
    $region18: #{_lambda_.1} parent=1 // pred_check
      _
    $region19: #{_lambda_.1} parent=1 // pred_check_branch
      %26 = sbr.rel (0) target = $region21
    $region20: #{_lambda_.1} parent=1 // pred_region
      _
    $region21: #{_lambda_.1} parent=1 // pred_fallthru
      _
    // Predicated region
    $region22: #{_lambda_.1} parent=1 // pred_check
      _
    $region23: #{_lambda_.1} parent=1 // pred_check_branch
      %28 = sbr.rel (0) target = $region25
    $region24: #{_lambda_.1} parent=1 // pred_region
      _
    $region25: #{_lambda_.1} parent=1 // pred_fallthru
      _
    // Predicated region
    $region26: #{_lambda_.1} parent=1 // pred_check
      _
    $region27: #{_lambda_.1} parent=1 // pred_check_branch
      %30 = sbr.rel (0) target = $region29
    $region28: #{_lambda_.1} parent=1 // pred_region
      _
    $region29: #{_lambda_.1} parent=1 // pred_fallthru
      _
    // Predicated region
    $region30: #{_lambda_.1} parent=1 // pred_check
      _
    $region31: #{_lambda_.1} parent=1 // pred_check_branch
      %32 = sbr.rel (0) target = $region33
    $region32: #{_lambda_.1} parent=1 // pred_region
      _
    $region33: #{_lambda_.1} parent=1 // pred_fallthru
      _
    // Predicated region
    $region34: #{_lambda_.1} parent=1 // pred_check
      _
    $region35: #{_lambda_.1} parent=1 // pred_check_branch
      %34 = sbr.rel (0) target = $region37
    $region36: #{_lambda_.1} parent=1 // pred_region
      _
    $region37: #{_lambda_.1} parent=1 // pred_fallthru
      _
    // Predicated region
    $region38: #{_lambda_.1} parent=1 // pred_check
      _
    $region39: #{_lambda_.1} parent=1 // pred_check_branch
      %36 = sbr.rel (0) target = $region41
    $region40: #{_lambda_.1} parent=1 // pred_region
      _
    $region41: #{_lambda_.1} parent=1 // pred_fallthru
      _
    // Predicated region
    $region42: #{_lambda_.1} parent=1 // pred_check
      _
    $region43: #{_lambda_.1} parent=1 // pred_check_branch
      %38 = sbr.rel (0) target = $region45
    $region44: #{_lambda_.1} parent=1 // pred_region
      _
    $region45: #{_lambda_.1} parent=1 // pred_fallthru
      _
    %v40 = vld [vmem:[%s0] sm:$0xf]
    %v41 = vld [vmem:[%s1] sm:$0xff]
    %v42 = vld [vmem:[%s1 + $0x8] sm:$0xff]
    %v43 = vld [vmem:[%s1 + $0x10] sm:$0xff]
    %v44 = vld [vmem:[%s1 + $0x18] sm:$0xff]
    %v45 = vld [vmem:[%s1 + $0x20] sm:$0xff]
    %v46 = vld [vmem:[%s1 + $0x28] sm:$0xff]
    %v47 = vld [vmem:[%s1 + $0x30] sm:$0xff]
    %v48 = vld [vmem:[%s1 + $0x38] sm:$0xff]
    %v49 = vld [vmem:[%s1 + $0x40] sm:$0xff]
    %v50 = vld [vmem:[%s1 + $0x48] sm:$0xff]
    %v51 = vld [vmem:[%s1 + $0x50] sm:$0xff]
    %v52 = vld [vmem:[%s1 + $0x58] sm:$0xff]
    %v53 = vld [vmem:[%s1 + $0x60] sm:$0xff]
    %v54 = vld [vmem:[%s1 + $0x68] sm:$0xff]
    %v55 = vld [vmem:[%s1 + $0x70] sm:$0xff]
    %v56 = vld [vmem:[%s1 + $0x78] sm:$0xff]
    %v57 = vld [vmem:[%s2] sm:$0x3]
    %v59 = vlaneseq
    %v60 = vshrl.u32 %v59, 7
    %v61 = vsub.s32 0, %v60
    %v62 = vrot.slane %v57, %v61
    %v63 = vlaneseq
    %v64 = vshrl.u32 %v63, 7
    %v65 = vsub.s32 1, %v64
    %v66 = vrot.slane %v57, %v65
    %v85 = vunpack.c.l.b16 %v41
    %v86 = vunpack.c.h.b16 %v41
    %v87 = vunpack.c.l.b16 %v42
    %v88 = vunpack.c.h.b16 %v42
    %v89 = vunpack.c.l.b16 %v43
    %v90 = vunpack.c.h.b16 %v43
    %v91 = vunpack.c.l.b16 %v44
    %v92 = vunpack.c.h.b16 %v44
    %v93 = vunpack.c.l.b16 %v45
    %v94 = vunpack.c.h.b16 %v45
    %v95 = vunpack.c.l.b16 %v46
    %v96 = vunpack.c.h.b16 %v46
    %v97 = vunpack.c.l.b16 %v47
    %v98 = vunpack.c.h.b16 %v47
    %v99 = vunpack.c.l.b16 %v48
    %v100 = vunpack.c.h.b16 %v48
    %v101 = vunpack.c.l.b16 %v49
    %v102 = vunpack.c.h.b16 %v49
    %v103 = vunpack.c.l.b16 %v50
    %v104 = vunpack.c.h.b16 %v50
    %v105 = vunpack.c.l.b16 %v51
    %v106 = vunpack.c.h.b16 %v51
    %v107 = vunpack.c.l.b16 %v52
    %v108 = vunpack.c.h.b16 %v52
    %v109 = vunpack.c.l.b16 %v53
    %v110 = vunpack.c.h.b16 %v53
    %v111 = vunpack.c.l.b16 %v54
    %v112 = vunpack.c.h.b16 %v54
    %v113 = vunpack.c.l.b16 %v55
    %v114 = vunpack.c.h.b16 %v55
    %v115 = vunpack.c.l.b16 %v56
    %v116 = vunpack.c.h.b16 %v56
    %v117 = vpack.c.b16 %v87, %v85
    %v118 = vpack.c.b16 %v88, %v86
    %v119 = vpack.c.b16 %v91, %v89
    %v120 = vpack.c.b16 %v92, %v90
    %v121 = vpack.c.b16 %v95, %v93
    %v122 = vpack.c.b16 %v96, %v94
    %v123 = vpack.c.b16 %v99, %v97
    %v124 = vpack.c.b16 %v100, %v98
    %v125 = vpack.c.b16 %v103, %v101
    %v126 = vpack.c.b16 %v104, %v102
    %v127 = vpack.c.b16 %v107, %v105
    %v128 = vpack.c.b16 %v108, %v106
    %v129 = vpack.c.b16 %v111, %v109
    %v130 = vpack.c.b16 %v112, %v110
    %v131 = vpack.c.b16 %v115, %v113
    %v132 = vpack.c.b16 %v116, %v114
    %149 = vmatprep.subr.bf16.mxu0 %v118
    %150 = vmatpush1.bf16.msra.mxu0 %v117
    %151 = vmatprep.subr.bf16.mxu0 %v120
    %152 = vmatpush1.bf16.msra.mxu0 %v119
    %153 = vmatprep.subr.bf16.mxu0 %v122
    %154 = vmatpush1.bf16.msra.mxu0 %v121
    %155 = vmatprep.subr.bf16.mxu0 %v124
    %156 = vmatpush1.bf16.msra.mxu0 %v123
    %157 = vmatprep.subr.bf16.mxu0 %v126
    %158 = vmatpush1.bf16.msra.mxu0 %v125
    %159 = vmatprep.subr.bf16.mxu0 %v128
    %160 = vmatpush1.bf16.msra.mxu0 %v127
    %161 = vmatprep.subr.bf16.mxu0 %v130
    %162 = vmatpush1.bf16.msra.mxu0 %v129
    %163 = vmatprep.subr.bf16.mxu0 %v132
    %164 = vmatpush1.bf16.msra.mxu0 %v131
    %165 = vmatprep.subr.bf16.mxu0 0
    %166 = vmatpush1.bf16.msra.mxu0 0
    %167 = vmatprep.subr.bf16.mxu0 0
    %168 = vmatpush1.bf16.msra.mxu0 0
    %169 = vmatprep.subr.bf16.mxu0 0
    %170 = vmatpush1.bf16.msra.mxu0 0
    %171 = vmatprep.subr.bf16.mxu0 0
    %172 = vmatpush1.bf16.msra.mxu0 0
    %173 = vmatprep.subr.bf16.mxu0 0
    %174 = vmatpush1.bf16.msra.mxu0 0
    %175 = vmatprep.subr.bf16.mxu0 0
    %176 = vmatpush1.bf16.msra.mxu0 0
    %177 = vmatprep.subr.bf16.mxu0 0
    %178 = vmatpush1.bf16.msra.mxu0 0
    %179 = vmatprep.subr.bf16.mxu0 0
    %180 = vmatpush1.bf16.msra.mxu0 0
    %181 = vmatprep.mubr.bf16.mxu0 0
    %182 = vmatmul.mubr.bf16.gmra.mrb[0].mxu0 %v40
    %v183 = vpop.f32.mrb[0].mxu0
    %v184 = vadd.f32 %v62, %v183
    %v185 = vpop.f32.mrb[0].mxu0
    %v186 = vadd.f32 %v66, %v185
    %v187 = vpop.f32.mrb[0].mxu0
    %v188 = vpop.f32.mrb[0].mxu0
    %189 = vdwg.mxu0
    %v190 = vmax.f32 %v184, 0.0
    %v191 = vmax.f32 %v186, 0.0
    %v192 = vpack.c.bf16 %v190, %v190
    %v193 = vpack.c.bf16 %v191, %v191
    %v194 = vld [vmem:[%s3] sm:$0xff]
    %v195 = vld [vmem:[%s3 + $0x8] sm:$0xff]
    %v196 = vld [vmem:[%s3 + $0x10] sm:$0xff]
    %v197 = vld [vmem:[%s3 + $0x18] sm:$0xff]
    %v198 = vld [vmem:[%s3 + $0x20] sm:$0xff]
    %v199 = vld [vmem:[%s3 + $0x28] sm:$0xff]
    %v200 = vld [vmem:[%s3 + $0x30] sm:$0xff]
    %v201 = vld [vmem:[%s3 + $0x38] sm:$0xff]
    %v202 = vld [vmem:[%s3 + $0x40] sm:$0xff]
    %v203 = vld [vmem:[%s3 + $0x48] sm:$0xff]
    %v204 = vld [vmem:[%s3 + $0x50] sm:$0xff]
    %v205 = vld [vmem:[%s3 + $0x58] sm:$0xff]
    %v206 = vld [vmem:[%s3 + $0x60] sm:$0xff]
    %v207 = vld [vmem:[%s3 + $0x68] sm:$0xff]
    %v208 = vld [vmem:[%s3 + $0x70] sm:$0xff]
    %v209 = vld [vmem:[%s3 + $0x78] sm:$0xff]
    %v210 = vld [vmem:[%s3 + $0x80] sm:$0xff]
    %v211 = vld [vmem:[%s3 + $0x88] sm:$0xff]
    %v212 = vld [vmem:[%s3 + $0x90] sm:$0xff]
    %v213 = vld [vmem:[%s3 + $0x98] sm:$0xff]
    %v214 = vld [vmem:[%s3 + $0xa0] sm:$0xff]
    %v215 = vld [vmem:[%s3 + $0xa8] sm:$0xff]
    %v216 = vld [vmem:[%s3 + $0xb0] sm:$0xff]
    %v217 = vld [vmem:[%s3 + $0xb8] sm:$0xff]
    %v218 = vld [vmem:[%s3 + $0xc0] sm:$0xff]
    %v219 = vld [vmem:[%s3 + $0xc8] sm:$0xff]
    %v220 = vld [vmem:[%s3 + $0xd0] sm:$0xff]
    %v221 = vld [vmem:[%s3 + $0xd8] sm:$0xff]
    %v222 = vld [vmem:[%s3 + $0xe0] sm:$0xff]
    %v223 = vld [vmem:[%s3 + $0xe8] sm:$0xff]
    %v224 = vld [vmem:[%s3 + $0xf0] sm:$0xff]
    %v225 = vld [vmem:[%s3 + $0xf8] sm:$0xff]
    %v226 = vld [vmem:[%s4] sm:$0x3]
    %v228 = vlaneseq
    %v229 = vshrl.u32 %v228, 7
    %v230 = vsub.s32 0, %v229
    %v231 = vrot.slane %v226, %v230
    %v232 = vlaneseq
    %v233 = vshrl.u32 %v232, 7
    %v234 = vsub.s32 1, %v233
    %v235 = vrot.slane %v226, %v234
    %v270 = vunpack.c.l.b16 %v194
    %v271 = vunpack.c.h.b16 %v194
    %v272 = vunpack.c.l.b16 %v195
    %v273 = vunpack.c.h.b16 %v195
    %v274 = vunpack.c.l.b16 %v196
    %v275 = vunpack.c.h.b16 %v196
    %v276 = vunpack.c.l.b16 %v197
    %v277 = vunpack.c.h.b16 %v197
    %v278 = vunpack.c.l.b16 %v198
    %v279 = vunpack.c.h.b16 %v198
    %v280 = vunpack.c.l.b16 %v199
    %v281 = vunpack.c.h.b16 %v199
    %v282 = vunpack.c.l.b16 %v200
    %v283 = vunpack.c.h.b16 %v200
    %v284 = vunpack.c.l.b16 %v201
    %v285 = vunpack.c.h.b16 %v201
    %v286 = vunpack.c.l.b16 %v202
    %v287 = vunpack.c.h.b16 %v202
    %v288 = vunpack.c.l.b16 %v203
    %v289 = vunpack.c.h.b16 %v203
    %v290 = vunpack.c.l.b16 %v204
    %v291 = vunpack.c.h.b16 %v204
    %v292 = vunpack.c.l.b16 %v205
    %v293 = vunpack.c.h.b16 %v205
    %v294 = vunpack.c.l.b16 %v206
    %v295 = vunpack.c.h.b16 %v206
    %v296 = vunpack.c.l.b16 %v207
    %v297 = vunpack.c.h.b16 %v207
    %v298 = vunpack.c.l.b16 %v208
    %v299 = vunpack.c.h.b16 %v208
    %v300 = vunpack.c.l.b16 %v209
    %v301 = vunpack.c.h.b16 %v209
    %v302 = vunpack.c.l.b16 %v210
    %v303 = vunpack.c.h.b16 %v210
    %v304 = vunpack.c.l.b16 %v211
    %v305 = vunpack.c.h.b16 %v211
    %v306 = vunpack.c.l.b16 %v212
    %v307 = vunpack.c.h.b16 %v212
    %v308 = vunpack.c.l.b16 %v213
    %v309 = vunpack.c.h.b16 %v213
    %v310 = vunpack.c.l.b16 %v214
    %v311 = vunpack.c.h.b16 %v214
    %v312 = vunpack.c.l.b16 %v215
    %v313 = vunpack.c.h.b16 %v215
    %v314 = vunpack.c.l.b16 %v216
    %v315 = vunpack.c.h.b16 %v216
    %v316 = vunpack.c.l.b16 %v217
    %v317 = vunpack.c.h.b16 %v217
    %v318 = vunpack.c.l.b16 %v218
    %v319 = vunpack.c.h.b16 %v218
    %v320 = vunpack.c.l.b16 %v219
    %v321 = vunpack.c.h.b16 %v219
    %v322 = vunpack.c.l.b16 %v220
    %v323 = vunpack.c.h.b16 %v220
    %v324 = vunpack.c.l.b16 %v221
    %v325 = vunpack.c.h.b16 %v221
    %v326 = vunpack.c.l.b16 %v222
    %v327 = vunpack.c.h.b16 %v222
    %v328 = vunpack.c.l.b16 %v223
    %v329 = vunpack.c.h.b16 %v223
    %v330 = vunpack.c.l.b16 %v224
    %v331 = vunpack.c.h.b16 %v224
    %v332 = vunpack.c.l.b16 %v225
    %v333 = vunpack.c.h.b16 %v225
    %v334 = vpack.c.b16 %v272, %v270
    %v335 = vpack.c.b16 %v273, %v271
    %v336 = vpack.c.b16 %v276, %v274
    %v337 = vpack.c.b16 %v277, %v275
    %v338 = vpack.c.b16 %v280, %v278
    %v339 = vpack.c.b16 %v281, %v279
    %v340 = vpack.c.b16 %v284, %v282
    %v341 = vpack.c.b16 %v285, %v283
    %v342 = vpack.c.b16 %v288, %v286
    %v343 = vpack.c.b16 %v289, %v287
    %v344 = vpack.c.b16 %v292, %v290
    %v345 = vpack.c.b16 %v293, %v291
    %v346 = vpack.c.b16 %v296, %v294
    %v347 = vpack.c.b16 %v297, %v295
    %v348 = vpack.c.b16 %v300, %v298
    %v349 = vpack.c.b16 %v301, %v299
    %v350 = vpack.c.b16 %v304, %v302
    %v351 = vpack.c.b16 %v305, %v303
    %v352 = vpack.c.b16 %v308, %v306
    %v353 = vpack.c.b16 %v309, %v307
    %v354 = vpack.c.b16 %v312, %v310
    %v355 = vpack.c.b16 %v313, %v311
    %v356 = vpack.c.b16 %v316, %v314
    %v357 = vpack.c.b16 %v317, %v315
    %v358 = vpack.c.b16 %v320, %v318
    %v359 = vpack.c.b16 %v321, %v319
    %v360 = vpack.c.b16 %v324, %v322
    %v361 = vpack.c.b16 %v325, %v323
    %v362 = vpack.c.b16 %v328, %v326
    %v363 = vpack.c.b16 %v329, %v327
    %v364 = vpack.c.b16 %v332, %v330
    %v365 = vpack.c.b16 %v333, %v331
    %398 = vmatprep.subr.bf16.mxu0 %v335
    %399 = vmatpush1.bf16.msra.mxu0 %v334
    %400 = vmatprep.subr.bf16.mxu0 %v337
    %401 = vmatpush1.bf16.msra.mxu0 %v336
    %402 = vmatprep.subr.bf16.mxu0 %v339
    %403 = vmatpush1.bf16.msra.mxu0 %v338
    %404 = vmatprep.subr.bf16.mxu0 %v341
    %405 = vmatpush1.bf16.msra.mxu0 %v340
    %406 = vmatprep.subr.bf16.mxu0 %v343
    %407 = vmatpush1.bf16.msra.mxu0 %v342
    %408 = vmatprep.subr.bf16.mxu0 %v345
    %409 = vmatpush1.bf16.msra.mxu0 %v344
    %410 = vmatprep.subr.bf16.mxu0 %v347
    %411 = vmatpush1.bf16.msra.mxu0 %v346
    %412 = vmatprep.subr.bf16.mxu0 %v349
    %413 = vmatpush1.bf16.msra.mxu0 %v348
    %414 = vmatprep.subr.bf16.mxu0 %v351
    %415 = vmatpush1.bf16.msra.mxu0 %v350
    %416 = vmatprep.subr.bf16.mxu0 %v353
    %417 = vmatpush1.bf16.msra.mxu0 %v352
    %418 = vmatprep.subr.bf16.mxu0 %v355
    %419 = vmatpush1.bf16.msra.mxu0 %v354
    %420 = vmatprep.subr.bf16.mxu0 %v357
    %421 = vmatpush1.bf16.msra.mxu0 %v356
    %422 = vmatprep.subr.bf16.mxu0 %v359
    %423 = vmatpush1.bf16.msra.mxu0 %v358
    %424 = vmatprep.subr.bf16.mxu0 %v361
    %425 = vmatpush1.bf16.msra.mxu0 %v360
    %426 = vmatprep.subr.bf16.mxu0 %v363
    %427 = vmatpush1.bf16.msra.mxu0 %v362
    %428 = vmatprep.subr.bf16.mxu0 %v365
    %429 = vmatpush1.bf16.msra.mxu0 %v364
    %430 = vmatprep.mubr.bf16.mxu0 %v193
    %431 = vmatmul.mubr.bf16.gmra.mrb[0].mxu0 %v192
    %v432 = vpop.f32.mrb[0].mxu0
    %v433 = vadd.f32 %v231, %v432
    %v434 = vpop.f32.mrb[0].mxu0
    %v435 = vadd.f32 %v235, %v434
    %v436 = vpop.f32.mrb[0].mxu0
    %v437 = vpop.f32.mrb[0].mxu0
    %438 = vdwg.mxu0
    %v439 = vmax.f32 %v433, 0.0
    %v440 = vmax.f32 %v435, 0.0
    %v441 = vpack.c.bf16 %v439, %v439
    %v442 = vpack.c.bf16 %v440, %v440
    %v443 = vld [vmem:[%s5] sm:$0xff]
    %v444 = vld [vmem:[%s5 + $0x8] sm:$0xff]
    %v445 = vld [vmem:[%s5 + $0x10] sm:$0xff]
    %v446 = vld [vmem:[%s5 + $0x18] sm:$0xff]
    %v447 = vld [vmem:[%s5 + $0x20] sm:$0xff]
    %v448 = vld [vmem:[%s5 + $0x28] sm:$0xff]
    %v449 = vld [vmem:[%s5 + $0x30] sm:$0xff]
    %v450 = vld [vmem:[%s5 + $0x38] sm:$0xff]
    %v451 = vld [vmem:[%s5 + $0x40] sm:$0xff]
    %v452 = vld [vmem:[%s5 + $0x48] sm:$0xff]
    %v453 = vld [vmem:[%s5 + $0x50] sm:$0xff]
    %v454 = vld [vmem:[%s5 + $0x58] sm:$0xff]
    %v455 = vld [vmem:[%s5 + $0x60] sm:$0xff]
    %v456 = vld [vmem:[%s5 + $0x68] sm:$0xff]
    %v457 = vld [vmem:[%s5 + $0x70] sm:$0xff]
    %v458 = vld [vmem:[%s5 + $0x78] sm:$0xff]
    %v459 = vld [vmem:[%s5 + $0x80] sm:$0xff]
    %v460 = vld [vmem:[%s5 + $0x88] sm:$0xff]
    %v461 = vld [vmem:[%s5 + $0x90] sm:$0xff]
    %v462 = vld [vmem:[%s5 + $0x98] sm:$0xff]
    %v463 = vld [vmem:[%s5 + $0xa0] sm:$0xff]
    %v464 = vld [vmem:[%s5 + $0xa8] sm:$0xff]
    %v465 = vld [vmem:[%s5 + $0xb0] sm:$0xff]
    %v466 = vld [vmem:[%s5 + $0xb8] sm:$0xff]
    %v467 = vld [vmem:[%s5 + $0xc0] sm:$0xff]
    %v468 = vld [vmem:[%s5 + $0xc8] sm:$0xff]
    %v469 = vld [vmem:[%s5 + $0xd0] sm:$0xff]
    %v470 = vld [vmem:[%s5 + $0xd8] sm:$0xff]
    %v471 = vld [vmem:[%s5 + $0xe0] sm:$0xff]
    %v472 = vld [vmem:[%s5 + $0xe8] sm:$0xff]
    %v473 = vld [vmem:[%s5 + $0xf0] sm:$0xff]
    %v474 = vld [vmem:[%s5 + $0xf8] sm:$0xff]
    %v475 = vld [vmem:[%s6] sm:$0x3]
    %v477 = vlaneseq
    %v478 = vshrl.u32 %v477, 7
    %v479 = vsub.s32 0, %v478
    %v480 = vrot.slane %v475, %v479
    %v481 = vlaneseq
    %v482 = vshrl.u32 %v481, 7
    %v483 = vsub.s32 1, %v482
    %v484 = vrot.slane %v475, %v483
    %v519 = vunpack.c.l.b16 %v443
    %v520 = vunpack.c.h.b16 %v443
    %v521 = vunpack.c.l.b16 %v444
    %v522 = vunpack.c.h.b16 %v444
    %v523 = vunpack.c.l.b16 %v445
    %v524 = vunpack.c.h.b16 %v445
    %v525 = vunpack.c.l.b16 %v446
    %v526 = vunpack.c.h.b16 %v446
    %v527 = vunpack.c.l.b16 %v447
    %v528 = vunpack.c.h.b16 %v447
    %v529 = vunpack.c.l.b16 %v448
    %v530 = vunpack.c.h.b16 %v448
    %v531 = vunpack.c.l.b16 %v449
    %v532 = vunpack.c.h.b16 %v449
    %v533 = vunpack.c.l.b16 %v450
    %v534 = vunpack.c.h.b16 %v450
    %v535 = vunpack.c.l.b16 %v451
    %v536 = vunpack.c.h.b16 %v451
    %v537 = vunpack.c.l.b16 %v452
    %v538 = vunpack.c.h.b16 %v452
    %v539 = vunpack.c.l.b16 %v453
    %v540 = vunpack.c.h.b16 %v453
    %v541 = vunpack.c.l.b16 %v454
    %v542 = vunpack.c.h.b16 %v454
    %v543 = vunpack.c.l.b16 %v455
    %v544 = vunpack.c.h.b16 %v455
    %v545 = vunpack.c.l.b16 %v456
    %v546 = vunpack.c.h.b16 %v456
    %v547 = vunpack.c.l.b16 %v457
    %v548 = vunpack.c.h.b16 %v457
    %v549 = vunpack.c.l.b16 %v458
    %v550 = vunpack.c.h.b16 %v458
    %v551 = vunpack.c.l.b16 %v459
    %v552 = vunpack.c.h.b16 %v459
    %v553 = vunpack.c.l.b16 %v460
    %v554 = vunpack.c.h.b16 %v460
    %v555 = vunpack.c.l.b16 %v461
    %v556 = vunpack.c.h.b16 %v461
    %v557 = vunpack.c.l.b16 %v462
    %v558 = vunpack.c.h.b16 %v462
    %v559 = vunpack.c.l.b16 %v463
    %v560 = vunpack.c.h.b16 %v463
    %v561 = vunpack.c.l.b16 %v464
    %v562 = vunpack.c.h.b16 %v464
    %v563 = vunpack.c.l.b16 %v465
    %v564 = vunpack.c.h.b16 %v465
    %v565 = vunpack.c.l.b16 %v466
    %v566 = vunpack.c.h.b16 %v466
    %v567 = vunpack.c.l.b16 %v467
    %v568 = vunpack.c.h.b16 %v467
    %v569 = vunpack.c.l.b16 %v468
    %v570 = vunpack.c.h.b16 %v468
    %v571 = vunpack.c.l.b16 %v469
    %v572 = vunpack.c.h.b16 %v469
    %v573 = vunpack.c.l.b16 %v470
    %v574 = vunpack.c.h.b16 %v470
    %v575 = vunpack.c.l.b16 %v471
    %v576 = vunpack.c.h.b16 %v471
    %v577 = vunpack.c.l.b16 %v472
    %v578 = vunpack.c.h.b16 %v472
    %v579 = vunpack.c.l.b16 %v473
    %v580 = vunpack.c.h.b16 %v473
    %v581 = vunpack.c.l.b16 %v474
    %v582 = vunpack.c.h.b16 %v474
    %v583 = vpack.c.b16 %v521, %v519
    %v584 = vpack.c.b16 %v522, %v520
    %v585 = vpack.c.b16 %v525, %v523
    %v586 = vpack.c.b16 %v526, %v524
    %v587 = vpack.c.b16 %v529, %v527
    %v588 = vpack.c.b16 %v530, %v528
    %v589 = vpack.c.b16 %v533, %v531
    %v590 = vpack.c.b16 %v534, %v532
    %v591 = vpack.c.b16 %v537, %v535
    %v592 = vpack.c.b16 %v538, %v536
    %v593 = vpack.c.b16 %v541, %v539
    %v594 = vpack.c.b16 %v542, %v540
    %v595 = vpack.c.b16 %v545, %v543
    %v596 = vpack.c.b16 %v546, %v544
    %v597 = vpack.c.b16 %v549, %v547
    %v598 = vpack.c.b16 %v550, %v548
    %v599 = vpack.c.b16 %v553, %v551
    %v600 = vpack.c.b16 %v554, %v552
    %v601 = vpack.c.b16 %v557, %v555
    %v602 = vpack.c.b16 %v558, %v556
    %v603 = vpack.c.b16 %v561, %v559
    %v604 = vpack.c.b16 %v562, %v560
    %v605 = vpack.c.b16 %v565, %v563
    %v606 = vpack.c.b16 %v566, %v564
    %v607 = vpack.c.b16 %v569, %v567
    %v608 = vpack.c.b16 %v570, %v568
    %v609 = vpack.c.b16 %v573, %v571
    %v610 = vpack.c.b16 %v574, %v572
    %v611 = vpack.c.b16 %v577, %v575
    %v612 = vpack.c.b16 %v578, %v576
    %v613 = vpack.c.b16 %v581, %v579
    %v614 = vpack.c.b16 %v582, %v580
    %647 = vmatprep.subr.bf16.mxu0 %v584
    %648 = vmatpush1.bf16.msra.mxu0 %v583
    %649 = vmatprep.subr.bf16.mxu0 %v586
    %650 = vmatpush1.bf16.msra.mxu0 %v585
    %651 = vmatprep.subr.bf16.mxu0 %v588
    %652 = vmatpush1.bf16.msra.mxu0 %v587
    %653 = vmatprep.subr.bf16.mxu0 %v590
    %654 = vmatpush1.bf16.msra.mxu0 %v589
    %655 = vmatprep.subr.bf16.mxu0 %v592
    %656 = vmatpush1.bf16.msra.mxu0 %v591
    %657 = vmatprep.subr.bf16.mxu0 %v594
    %658 = vmatpush1.bf16.msra.mxu0 %v593
    %659 = vmatprep.subr.bf16.mxu0 %v596
    %660 = vmatpush1.bf16.msra.mxu0 %v595
    %661 = vmatprep.subr.bf16.mxu0 %v598
    %662 = vmatpush1.bf16.msra.mxu0 %v597
    %663 = vmatprep.subr.bf16.mxu0 %v600
    %664 = vmatpush1.bf16.msra.mxu0 %v599
    %665 = vmatprep.subr.bf16.mxu0 %v602
    %666 = vmatpush1.bf16.msra.mxu0 %v601
    %667 = vmatprep.subr.bf16.mxu0 %v604
    %668 = vmatpush1.bf16.msra.mxu0 %v603
    %669 = vmatprep.subr.bf16.mxu0 %v606
    %670 = vmatpush1.bf16.msra.mxu0 %v605
    %671 = vmatprep.subr.bf16.mxu0 %v608
    %672 = vmatpush1.bf16.msra.mxu0 %v607
    %673 = vmatprep.subr.bf16.mxu0 %v610
    %674 = vmatpush1.bf16.msra.mxu0 %v609
    %675 = vmatprep.subr.bf16.mxu0 %v612
    %676 = vmatpush1.bf16.msra.mxu0 %v611
    %677 = vmatprep.subr.bf16.mxu0 %v614
    %678 = vmatpush1.bf16.msra.mxu0 %v613
    %679 = vmatprep.mubr.bf16.mxu0 %v442
    %680 = vmatmul.mubr.bf16.gmra.mrb[0].mxu0 %v441
    %v681 = vpop.f32.mrb[0].mxu0
    %v682 = vadd.f32 %v480, %v681
    %v683 = vpop.f32.mrb[0].mxu0
    %v684 = vadd.f32 %v484, %v683
    %v685 = vpop.f32.mrb[0].mxu0
    %v686 = vpop.f32.mrb[0].mxu0
    %687 = vdwg.mxu0
    %v688 = vmax.f32 %v682, 0.0
    %v689 = vmax.f32 %v684, 0.0
    %v690 = vpack.c.bf16 %v688, %v688
    %v691 = vpack.c.bf16 %v689, %v689
    %v692 = vld [vmem:[%s7] sm:$0xff]
    %v693 = vld [vmem:[%s7 + $0x8] sm:$0xff]
    %v694 = vld [vmem:[%s7 + $0x10] sm:$0xff]
    %v695 = vld [vmem:[%s7 + $0x18] sm:$0xff]
    %v696 = vld [vmem:[%s7 + $0x20] sm:$0xff]
    %v697 = vld [vmem:[%s7 + $0x28] sm:$0xff]
    %v698 = vld [vmem:[%s7 + $0x30] sm:$0xff]
    %v699 = vld [vmem:[%s7 + $0x38] sm:$0xff]
    %v700 = vld [vmem:[%s7 + $0x40] sm:$0xff]
    %v701 = vld [vmem:[%s7 + $0x48] sm:$0xff]
    %v702 = vld [vmem:[%s7 + $0x50] sm:$0xff]
    %v703 = vld [vmem:[%s7 + $0x58] sm:$0xff]
    %v704 = vld [vmem:[%s7 + $0x60] sm:$0xff]
    %v705 = vld [vmem:[%s7 + $0x68] sm:$0xff]
    %v706 = vld [vmem:[%s7 + $0x70] sm:$0xff]
    %v707 = vld [vmem:[%s7 + $0x78] sm:$0xff]
    %v708 = vld [vmem:[%s7 + $0x80] sm:$0xff]
    %v709 = vld [vmem:[%s7 + $0x88] sm:$0xff]
    %v710 = vld [vmem:[%s7 + $0x90] sm:$0xff]
    %v711 = vld [vmem:[%s7 + $0x98] sm:$0xff]
    %v712 = vld [vmem:[%s7 + $0xa0] sm:$0xff]
    %v713 = vld [vmem:[%s7 + $0xa8] sm:$0xff]
    %v714 = vld [vmem:[%s7 + $0xb0] sm:$0xff]
    %v715 = vld [vmem:[%s7 + $0xb8] sm:$0xff]
    %v716 = vld [vmem:[%s7 + $0xc0] sm:$0xff]
    %v717 = vld [vmem:[%s7 + $0xc8] sm:$0xff]
    %v718 = vld [vmem:[%s7 + $0xd0] sm:$0xff]
    %v719 = vld [vmem:[%s7 + $0xd8] sm:$0xff]
    %v720 = vld [vmem:[%s7 + $0xe0] sm:$0xff]
    %v721 = vld [vmem:[%s7 + $0xe8] sm:$0xff]
    %v722 = vld [vmem:[%s7 + $0xf0] sm:$0xff]
    %v723 = vld [vmem:[%s7 + $0xf8] sm:$0xff]
    %v724 = vld [vmem:[%s8] sm:$0x3]
    %v726 = vlaneseq
    %v727 = vshrl.u32 %v726, 7
    %v728 = vsub.s32 0, %v727
    %v729 = vrot.slane %v724, %v728
    %v730 = vlaneseq
    %v731 = vshrl.u32 %v730, 7
    %v732 = vsub.s32 1, %v731
    %v733 = vrot.slane %v724, %v732
    %v768 = vunpack.c.l.b16 %v692
    %v769 = vunpack.c.h.b16 %v692
    %v770 = vunpack.c.l.b16 %v693
    %v771 = vunpack.c.h.b16 %v693
    %v772 = vunpack.c.l.b16 %v694
    %v773 = vunpack.c.h.b16 %v694
    %v774 = vunpack.c.l.b16 %v695
    %v775 = vunpack.c.h.b16 %v695
    %v776 = vunpack.c.l.b16 %v696
    %v777 = vunpack.c.h.b16 %v696
    %v778 = vunpack.c.l.b16 %v697
    %v779 = vunpack.c.h.b16 %v697
    %v780 = vunpack.c.l.b16 %v698
    %v781 = vunpack.c.h.b16 %v698
    %v782 = vunpack.c.l.b16 %v699
    %v783 = vunpack.c.h.b16 %v699
    %v784 = vunpack.c.l.b16 %v700
    %v785 = vunpack.c.h.b16 %v700
    %v786 = vunpack.c.l.b16 %v701
    %v787 = vunpack.c.h.b16 %v701
    %v788 = vunpack.c.l.b16 %v702
    %v789 = vunpack.c.h.b16 %v702
    %v790 = vunpack.c.l.b16 %v703
    %v791 = vunpack.c.h.b16 %v703
    %v792 = vunpack.c.l.b16 %v704
    %v793 = vunpack.c.h.b16 %v704
    %v794 = vunpack.c.l.b16 %v705
    %v795 = vunpack.c.h.b16 %v705
    %v796 = vunpack.c.l.b16 %v706
    %v797 = vunpack.c.h.b16 %v706
    %v798 = vunpack.c.l.b16 %v707
    %v799 = vunpack.c.h.b16 %v707
    %v800 = vunpack.c.l.b16 %v708
    %v801 = vunpack.c.h.b16 %v708
    %v802 = vunpack.c.l.b16 %v709
    %v803 = vunpack.c.h.b16 %v709
    %v804 = vunpack.c.l.b16 %v710
    %v805 = vunpack.c.h.b16 %v710
    %v806 = vunpack.c.l.b16 %v711
    %v807 = vunpack.c.h.b16 %v711
    %v808 = vunpack.c.l.b16 %v712
    %v809 = vunpack.c.h.b16 %v712
    %v810 = vunpack.c.l.b16 %v713
    %v811 = vunpack.c.h.b16 %v713
    %v812 = vunpack.c.l.b16 %v714
    %v813 = vunpack.c.h.b16 %v714
    %v814 = vunpack.c.l.b16 %v715
    %v815 = vunpack.c.h.b16 %v715
    %v816 = vunpack.c.l.b16 %v716
    %v817 = vunpack.c.h.b16 %v716
    %v818 = vunpack.c.l.b16 %v717
    %v819 = vunpack.c.h.b16 %v717
    %v820 = vunpack.c.l.b16 %v718
    %v821 = vunpack.c.h.b16 %v718
    %v822 = vunpack.c.l.b16 %v719
    %v823 = vunpack.c.h.b16 %v719
    %v824 = vunpack.c.l.b16 %v720
    %v825 = vunpack.c.h.b16 %v720
    %v826 = vunpack.c.l.b16 %v721
    %v827 = vunpack.c.h.b16 %v721
    %v828 = vunpack.c.l.b16 %v722
    %v829 = vunpack.c.h.b16 %v722
    %v830 = vunpack.c.l.b16 %v723
    %v831 = vunpack.c.h.b16 %v723
    %v832 = vpack.c.b16 %v770, %v768
    %v833 = vpack.c.b16 %v771, %v769
    %v834 = vpack.c.b16 %v774, %v772
    %v835 = vpack.c.b16 %v775, %v773
    %v836 = vpack.c.b16 %v778, %v776
    %v837 = vpack.c.b16 %v779, %v777
    %v838 = vpack.c.b16 %v782, %v780
    %v839 = vpack.c.b16 %v783, %v781
    %v840 = vpack.c.b16 %v786, %v784
    %v841 = vpack.c.b16 %v787, %v785
    %v842 = vpack.c.b16 %v790, %v788
    %v843 = vpack.c.b16 %v791, %v789
    %v844 = vpack.c.b16 %v794, %v792
    %v845 = vpack.c.b16 %v795, %v793
    %v846 = vpack.c.b16 %v798, %v796
    %v847 = vpack.c.b16 %v799, %v797
    %v848 = vpack.c.b16 %v802, %v800
    %v849 = vpack.c.b16 %v803, %v801
    %v850 = vpack.c.b16 %v806, %v804
    %v851 = vpack.c.b16 %v807, %v805
    %v852 = vpack.c.b16 %v810, %v808
    %v853 = vpack.c.b16 %v811, %v809
    %v854 = vpack.c.b16 %v814, %v812
    %v855 = vpack.c.b16 %v815, %v813
    %v856 = vpack.c.b16 %v818, %v816
    %v857 = vpack.c.b16 %v819, %v817
    %v858 = vpack.c.b16 %v822, %v820
    %v859 = vpack.c.b16 %v823, %v821
    %v860 = vpack.c.b16 %v826, %v824
    %v861 = vpack.c.b16 %v827, %v825
    %v862 = vpack.c.b16 %v830, %v828
    %v863 = vpack.c.b16 %v831, %v829
    %896 = vmatprep.subr.bf16.mxu0 %v833
    %897 = vmatpush1.bf16.msra.mxu0 %v832
    %898 = vmatprep.subr.bf16.mxu0 %v835
    %899 = vmatpush1.bf16.msra.mxu0 %v834
    %900 = vmatprep.subr.bf16.mxu0 %v837
    %901 = vmatpush1.bf16.msra.mxu0 %v836
    %902 = vmatprep.subr.bf16.mxu0 %v839
    %903 = vmatpush1.bf16.msra.mxu0 %v838
    %904 = vmatprep.subr.bf16.mxu0 %v841
    %905 = vmatpush1.bf16.msra.mxu0 %v840
    %906 = vmatprep.subr.bf16.mxu0 %v843
    %907 = vmatpush1.bf16.msra.mxu0 %v842
    %908 = vmatprep.subr.bf16.mxu0 %v845
    %909 = vmatpush1.bf16.msra.mxu0 %v844
    %910 = vmatprep.subr.bf16.mxu0 %v847
    %911 = vmatpush1.bf16.msra.mxu0 %v846
    %912 = vmatprep.subr.bf16.mxu0 %v849
    %913 = vmatpush1.bf16.msra.mxu0 %v848
    %914 = vmatprep.subr.bf16.mxu0 %v851
    %915 = vmatpush1.bf16.msra.mxu0 %v850
    %916 = vmatprep.subr.bf16.mxu0 %v853
    %917 = vmatpush1.bf16.msra.mxu0 %v852
    %918 = vmatprep.subr.bf16.mxu0 %v855
    %919 = vmatpush1.bf16.msra.mxu0 %v854
    %920 = vmatprep.subr.bf16.mxu0 %v857
    %921 = vmatpush1.bf16.msra.mxu0 %v856
    %922 = vmatprep.subr.bf16.mxu0 %v859
    %923 = vmatpush1.bf16.msra.mxu0 %v858
    %924 = vmatprep.subr.bf16.mxu0 %v861
    %925 = vmatpush1.bf16.msra.mxu0 %v860
    %926 = vmatprep.subr.bf16.mxu0 %v863
    %927 = vmatpush1.bf16.msra.mxu0 %v862
    %928 = vmatprep.mubr.bf16.mxu0 %v691
    %929 = vmatmul.mubr.bf16.gmra.mrb[0].mxu0 %v690
    %v930 = vpop.f32.mrb[0].mxu0
    %v931 = vadd.f32 %v729, %v930
    %v932 = vpop.f32.mrb[0].mxu0
    %v933 = vadd.f32 %v733, %v932
    %v934 = vpop.f32.mrb[0].mxu0
    %v935 = vpop.f32.mrb[0].mxu0
    %936 = vdwg.mxu0
    %v937 = vmax.f32 %v931, 0.0
    %v938 = vmax.f32 %v933, 0.0
    %v939 = vpack.c.bf16 %v937, %v937
    %v940 = vpack.c.bf16 %v938, %v938
    %v941 = vld [vmem:[%s9] sm:$0xf]
    %v942 = vld [vmem:[%s9 + $0x4] sm:$0xf]
    %v943 = vld [vmem:[%s9 + $0x8] sm:$0xf]
    %v944 = vld [vmem:[%s9 + $0xc] sm:$0xf]
    %v945 = vld [vmem:[%s9 + $0x10] sm:$0xf]
    %v946 = vld [vmem:[%s9 + $0x14] sm:$0xf]
    %v947 = vld [vmem:[%s9 + $0x18] sm:$0xf]
    %v948 = vld [vmem:[%s9 + $0x1c] sm:$0xf]
    %v949 = vld [vmem:[%s9 + $0x20] sm:$0xf]
    %v950 = vld [vmem:[%s9 + $0x24] sm:$0xf]
    %v951 = vld [vmem:[%s9 + $0x28] sm:$0xf]
    %v952 = vld [vmem:[%s9 + $0x2c] sm:$0xf]
    %v953 = vld [vmem:[%s9 + $0x30] sm:$0xf]
    %v954 = vld [vmem:[%s9 + $0x34] sm:$0xf]
    %v955 = vld [vmem:[%s9 + $0x38] sm:$0xf]
    %v956 = vld [vmem:[%s9 + $0x3c] sm:$0xf]
    %v957 = vld [vmem:[%s9 + $0x40] sm:$0xf]
    %v958 = vld [vmem:[%s9 + $0x44] sm:$0xf]
    %v959 = vld [vmem:[%s9 + $0x48] sm:$0xf]
    %v960 = vld [vmem:[%s9 + $0x4c] sm:$0xf]
    %v961 = vld [vmem:[%s9 + $0x50] sm:$0xf]
    %v962 = vld [vmem:[%s9 + $0x54] sm:$0xf]
    %v963 = vld [vmem:[%s9 + $0x58] sm:$0xf]
    %v964 = vld [vmem:[%s9 + $0x5c] sm:$0xf]
    %v965 = vld [vmem:[%s9 + $0x60] sm:$0xf]
    %v966 = vld [vmem:[%s9 + $0x64] sm:$0xf]
    %v967 = vld [vmem:[%s9 + $0x68] sm:$0xf]
    %v968 = vld [vmem:[%s9 + $0x6c] sm:$0xf]
    %v969 = vld [vmem:[%s9 + $0x70] sm:$0xf]
    %v970 = vld [vmem:[%s9 + $0x74] sm:$0xf]
    %v971 = vld [vmem:[%s9 + $0x78] sm:$0xf]
    %v972 = vld [vmem:[%s9 + $0x7c] sm:$0xf]
    %v973 = vld [vmem:[%s10] sm:$0x1]
    %v975 = vlaneseq
    %v976 = vshrl.u32 %v975, 7
    %v977 = vsub.s32 0, %v976
    %v978 = vrot.slane %v973, %v977
    %v1012 = vunpack.c.l.b16 %v941
    %v1013 = vunpack.c.l.b16 %v942
    %v1014 = vunpack.c.l.b16 %v943
    %v1015 = vunpack.c.l.b16 %v944
    %v1016 = vunpack.c.l.b16 %v945
    %v1017 = vunpack.c.l.b16 %v946
    %v1018 = vunpack.c.l.b16 %v947
    %v1019 = vunpack.c.l.b16 %v948
    %v1020 = vunpack.c.l.b16 %v949
    %v1021 = vunpack.c.l.b16 %v950
    %v1022 = vunpack.c.l.b16 %v951
    %v1023 = vunpack.c.l.b16 %v952
    %v1024 = vunpack.c.l.b16 %v953
    %v1025 = vunpack.c.l.b16 %v954
    %v1026 = vunpack.c.l.b16 %v955
    %v1027 = vunpack.c.l.b16 %v956
    %v1028 = vunpack.c.l.b16 %v957
    %v1029 = vunpack.c.l.b16 %v958
    %v1030 = vunpack.c.l.b16 %v959
    %v1031 = vunpack.c.l.b16 %v960
    %v1032 = vunpack.c.l.b16 %v961
    %v1033 = vunpack.c.l.b16 %v962
    %v1034 = vunpack.c.l.b16 %v963
    %v1035 = vunpack.c.l.b16 %v964
    %v1036 = vunpack.c.l.b16 %v965
    %v1037 = vunpack.c.l.b16 %v966
    %v1038 = vunpack.c.l.b16 %v967
    %v1039 = vunpack.c.l.b16 %v968
    %v1040 = vunpack.c.l.b16 %v969
    %v1041 = vunpack.c.l.b16 %v970
    %v1042 = vunpack.c.l.b16 %v971
    %v1043 = vunpack.c.l.b16 %v972
    %v1044 = vpack.c.b16 %v1013, %v1012
    %v1045 = vpack.c.b16 %v1015, %v1014
    %v1046 = vpack.c.b16 %v1017, %v1016
    %v1047 = vpack.c.b16 %v1019, %v1018
    %v1048 = vpack.c.b16 %v1021, %v1020
    %v1049 = vpack.c.b16 %v1023, %v1022
    %v1050 = vpack.c.b16 %v1025, %v1024
    %v1051 = vpack.c.b16 %v1027, %v1026
    %v1052 = vpack.c.b16 %v1029, %v1028
    %v1053 = vpack.c.b16 %v1031, %v1030
    %v1054 = vpack.c.b16 %v1033, %v1032
    %v1055 = vpack.c.b16 %v1035, %v1034
    %v1056 = vpack.c.b16 %v1037, %v1036
    %v1057 = vpack.c.b16 %v1039, %v1038
    %v1058 = vpack.c.b16 %v1041, %v1040
    %v1059 = vpack.c.b16 %v1043, %v1042
    %1076 = vmatprep.subr.bf16.mxu0 0
    %1077 = vmatpush1.bf16.msra.mxu0 %v1044
    %1078 = vmatprep.subr.bf16.mxu0 0
    %1079 = vmatpush1.bf16.msra.mxu0 %v1045
    %1080 = vmatprep.subr.bf16.mxu0 0
    %1081 = vmatpush1.bf16.msra.mxu0 %v1046
    %1082 = vmatprep.subr.bf16.mxu0 0
    %1083 = vmatpush1.bf16.msra.mxu0 %v1047
    %1084 = vmatprep.subr.bf16.mxu0 0
    %1085 = vmatpush1.bf16.msra.mxu0 %v1048
    %1086 = vmatprep.subr.bf16.mxu0 0
    %1087 = vmatpush1.bf16.msra.mxu0 %v1049
    %1088 = vmatprep.subr.bf16.mxu0 0
    %1089 = vmatpush1.bf16.msra.mxu0 %v1050
    %1090 = vmatprep.subr.bf16.mxu0 0
    %1091 = vmatpush1.bf16.msra.mxu0 %v1051
    %1092 = vmatprep.subr.bf16.mxu0 0
    %1093 = vmatpush1.bf16.msra.mxu0 %v1052
    %1094 = vmatprep.subr.bf16.mxu0 0
    %1095 = vmatpush1.bf16.msra.mxu0 %v1053
    %1096 = vmatprep.subr.bf16.mxu0 0
    %1097 = vmatpush1.bf16.msra.mxu0 %v1054
    %1098 = vmatprep.subr.bf16.mxu0 0
    %1099 = vmatpush1.bf16.msra.mxu0 %v1055
    %1100 = vmatprep.subr.bf16.mxu0 0
    %1101 = vmatpush1.bf16.msra.mxu0 %v1056
    %1102 = vmatprep.subr.bf16.mxu0 0
    %1103 = vmatpush1.bf16.msra.mxu0 %v1057
    %1104 = vmatprep.subr.bf16.mxu0 0
    %1105 = vmatpush1.bf16.msra.mxu0 %v1058
    %1106 = vmatprep.subr.bf16.mxu0 0
    %1107 = vmatpush1.bf16.msra.mxu0 %v1059
    %1108 = vmatprep.mubr.bf16.mxu0 %v940
    %1109 = vmatmul.mubr.bf16.gmra.mrb[0].mxu0 %v939
    %v1110 = vpop.f32.mrb[0].mxu0
    %v1111 = vadd.f32 %v978, %v1110
    %v1112 = vpop.f32.mrb[0].mxu0
    %v1113 = vpop.f32.mrb[0].mxu0
    %v1114 = vpop.f32.mrb[0].mxu0
    %1115 = vdwg.mxu0
    %v1116 = vsub.f32 0.0, %v1111
    %v1117 = vmul.f32 %v1116, 1.442695
    %v1118 = vpow.pop %v1117
    %v1119 = vadd.f32 %v1118, 1.0
    %v1120 = vrcp.pop %v1119
    %vm1121 = vcmask 523264
    %1122 = vst.msk [vmem:[#allocation2] sm:$0xff] %vm1121, %v1120
    // Predicated region
    $region46: #{_lambda_.1} parent=1 // pred_check
      _
    $region47: #{_lambda_.1} parent=1 // pred_check_branch
      %1124 = sbr.rel (0) target = $region49
    $region48: #{_lambda_.1} parent=1 // pred_region
      %s1126 = ssub.s32 128, 128
      %1127 = vsyncadd [#allocation3], %s1126
      %s1129 = sshll.u32 [#allocation2], 4
      %s1130 = int_to_ptr.vmem [resolvable:$true] %s1129
      %1132 = dma.vmem_to_hbm [thread:$0]  %s1130, 128, %s11, [#allocation3]
    $region49: #{_lambda_.1} parent=1 // pred_fallthru
      _
    // Predicated region
    $region50: #{_lambda_.1} parent=1 // pred_check
      _
    $region51: #{_lambda_.1} parent=1 // pred_check_branch
      %1134 = sbr.rel (0) target = $region53
    $region52: #{_lambda_.1} parent=1 // pred_region
      %1135 = dma.done [#allocation3], 128
    $region53: #{_lambda_.1} parent=1 // pred_fallthru
      _
    %1136 = vsyncpa [#allocation3], 1

</llo_original>
